<compile_context>
chip_gen: v5e
topology: v5e:2x2
jax: 0.10.0
libtpu: 0.0.40
codegen_flags: <defaults>
</compile_context>

<pallas_src>
import functools
import math

import jax
import jax.numpy as jnp
from jax import lax
from jax.experimental import pallas as pl
from jax.experimental.pallas import tpu as pltpu


def _round_up(x, m):
    return (x + m - 1) // m * m


def _default_fast_path_bytes():
    """Table-size threshold below which the table is kept resident in VMEM."""
    try:
        cap = pltpu.get_tpu_info().vmem_capacity_bytes
    except Exception:
        cap = 64 << 20  # conservative: v7x has 64 MiB per TensorCore
    return max(cap // 2, 16 << 20)


# -----------------------------------------------------------------------------
# Fast path: table resident in VMEM, gather = one-hot @ table on the MXU.
# -----------------------------------------------------------------------------
def _onehot_kernel(ids_ref, table_ref, out_ref, *, scale):
    ids = ids_ref[...]                                   # (rows, 1) int32
    rows = ids.shape[0]
    vocab = table_ref.shape[0]
    lane_iota = lax.broadcasted_iota(jnp.int32, (rows, vocab), 1)
    one_hot = (ids == lane_iota).astype(table_ref.dtype)
    acc = jnp.dot(one_hot, table_ref[...], preferred_element_type=jnp.float32)
    out_ref[...] = (acc * scale).astype(out_ref.dtype)


def _embedding_onehot(ids, table, batch, seq, rows_per_step, sublane, scale):
    vocab, model_dim = table.shape
    itemsize = jnp.dtype(table.dtype).itemsize
    n = ids.shape[0]

    rows = max(sublane,
               min(_round_up(rows_per_step, sublane), _round_up(n, sublane)))
    # Keep per-step live VMEM (one-hot temp + f32 acc + double-buffered out/ids
    # tiles) modest so the resident table has room on 64 MiB v7x parts.
    per_row = vocab * itemsize + model_dim * 4 + 2 * model_dim * itemsize + 8
    while rows > sublane and rows * per_row > (16 << 20):
        rows -= sublane

    n_pad = _round_up(n, rows)
    n_steps = n_pad // rows
    if n_pad != n:
        ids = jnp.pad(ids, (0, n_pad - n))               # pad with a valid id (0)
    ids2d = ids.reshape(n_pad, 1)

    table_bytes = vocab * model_dim * itemsize
    vmem_needed = table_bytes + 2 * rows * per_row + (8 << 20)

    out_flat = pl.pallas_call(
        functools.partial(_onehot_kernel, scale=scale),
        out_shape=jax.ShapeDtypeStruct((n_pad, model_dim), table.dtype),
        grid_spec=pltpu.PrefetchScalarGridSpec(
            num_scalar_prefetch=0,
            grid=(n_steps,),
            in_specs=[
                pl.BlockSpec((rows, 1), lambda i: (i, 0)),           # ids tile
                pl.BlockSpec((vocab, model_dim), lambda i: (0, 0)),  # resident table
            ],
            out_specs=pl.BlockSpec((rows, model_dim), lambda i: (i, 0)),
        ),
        compiler_params=pltpu.CompilerParams(
            dimension_semantics=("parallel",),   # v7x: tiles split over the 2 TCs
            vmem_limit_bytes=int(max(vmem_needed, 32 << 20)),
        ),
    )(ids2d, table)
    return out_flat[:n].reshape(batch, seq, model_dim)


# -----------------------------------------------------------------------------
# Fallback path: table stays in HBM, manual double-buffered DMA row gather.
# -----------------------------------------------------------------------------
def _gather_kernel(ids_ref, table_hbm, out_ref, buf, sems, *, rows, scale):
    """One (core, step) grid point gathers `rows` embedding rows via manual DMA.

    ids_ref   : SMEM (n_pad,) int32       -- all token ids (scalar prefetch)
    table_hbm : ANY  (vocab, model_dim)   -- embedding table, stays in HBM
    out_ref   : VMEM (rows, model_dim)    -- output tile for this grid point
    buf       : VMEM (2, rows, model_dim) -- double buffer
    sems      : DMA semaphores (2,)       -- one shared semaphore per slot
    """
    core = pl.program_id(0)
    step = pl.program_id(1)
    nsteps = pl.num_programs(1)
    g = core * nsteps + step                 # global token-tile index

    def issue(tile, slot):
        base = tile * rows

        def body(r, carry):
            tok = ids_ref[base + r]
            pltpu.make_async_copy(
                table_hbm.at[pl.ds(tok, 1)],     # (1, model_dim) HBM row
                buf.at[slot, pl.ds(r, 1)],       # (1, model_dim) VMEM row
                sems.at[slot],
            ).start()
            return carry

        # Rolled (not fully unrolled) issue loop: keeps the kernel body small
        # and off the scalar / vector-misc (DMA-descriptor) issue slots.
        lax.fori_loop(0, rows, body, 0, unroll=8)

    @pl.when(step == 0)
    def _():                                  # prime this core's pipeline
        issue(g, 0)

    @pl.when(step + 1 < nsteps)
    def _():                                  # prefetch next tile into other slot
        issue(g + 1, (step + 1) % 2)

    slot = step % 2
    # ONE aggregate wait per slot: DMA-semaphore accounting is by bytes, and the
    # whole (rows, model_dim) destination matches the sum of the row copies.
    pltpu.make_async_copy(buf.at[slot], buf.at[slot], sems.at[slot]).wait()

    # Fuse the * sqrt(model_dim) scale into the memory-bound copy-out.
    out_ref[...] = (buf[slot].astype(jnp.float32) * scale).astype(out_ref.dtype)


def _embedding_gather(ids, table, batch, seq, rows_per_step, sublane, scale):
    vocab, model_dim = table.shape
    dtype = table.dtype
    itemsize = jnp.dtype(dtype).itemsize
    n = ids.shape[0]

    # rows capped so (2x scratch + 2x pipelined out tile) fits a ~16 MiB budget
    # with headroom -- safe on v7x's 64 MiB VMEM and under v5e's 16 MiB default.
    budget = 16 << 20
    rows_cap = max(sublane,
                   (budget // (4 * model_dim * itemsize)) // sublane * sublane)
    rows = max(sublane,
               min(_round_up(rows_per_step, sublane), rows_cap,
                   _round_up(n, sublane)))

    split = 2       # leading "parallel" axis: one half of the tokens per v7x TC
    n_pad = _round_up(n, split * rows)
    inner_steps = (n_pad // rows) // split

    if n_pad != n:
        ids = jnp.pad(ids, (0, n_pad - n))    # pad with a valid id (0); sliced off below

    # TODO(synk): scalar-prefetching all ids into SMEM caps batch*seq at ~1e5 tokens;
    # chunk ids over an extra grid axis for longer inputs.

    vmem_needed = 4 * rows * model_dim * itemsize + (4 << 20)

    out_flat = pl.pallas_call(
        functools.partial(_gather_kernel, rows=rows, scale=scale),
        out_shape=jax.ShapeDtypeStruct((n_pad, model_dim), dtype),
        grid_spec=pltpu.PrefetchScalarGridSpec(
            num_scalar_prefetch=1,                            # ids -> SMEM
            grid=(split, inner_steps),
            in_specs=[pl.BlockSpec(memory_space=pl.ANY)],     # table stays in HBM
            out_specs=pl.BlockSpec(
                (rows, model_dim),
                lambda c, i, ids_ref: (c * inner_steps + i, 0)),
            scratch_shapes=[
                pltpu.VMEM((2, rows, model_dim), dtype),      # double buffer
                pltpu.SemaphoreType.DMA((2,)),                # one sem / slot
            ],
        ),
        compiler_params=pltpu.CompilerParams(
            # Outer axis may be split across TensorCores; inner axis must run
            # in order per core for the manual cross-step prefetch.
            dimension_semantics=("parallel", "arbitrary"),
            vmem_limit_bytes=int(max(vmem_needed, 32 << 20)),
        ),
    )(ids, table)
    return out_flat[:n].reshape(batch, seq, model_dim)


# -----------------------------------------------------------------------------
# Public wrapper
# -----------------------------------------------------------------------------
def embedding_forward(x, table, *, rows_per_step=256, fast_path_max_table_bytes=None):
    """x: (batch, seq) int ids; table: (vocab, model_dim).

    Returns table[x] * sqrt(model_dim) with shape (batch, seq, model_dim).
    Out-of-range ids are clamped (PyTorch would raise instead).
    """
    batch, seq = x.shape
    vocab, model_dim = table.shape
    itemsize = jnp.dtype(table.dtype).itemsize
    scale = float(math.sqrt(model_dim))
    # Dtype-aware sublane multiple for the out / buffer tiles (8 f32, 16 bf16, 32 int8).
    sublane = max(8, 32 // itemsize)

    n = batch * seq
    ids = jnp.clip(x.reshape(n).astype(jnp.int32), 0, vocab - 1)

    if fast_path_max_table_bytes is None:
        fast_path_max_table_bytes = _default_fast_path_bytes()
    table_bytes = vocab * model_dim * itemsize

    # TODO(synk): a medium-vocab path (table resident in VMEM, per-row dynamic slices
    # instead of one-hot matmul) would cover 2K < vocab while the table still fits VMEM.
    if table_bytes <= fast_path_max_table_bytes and vocab <= 2048:
        return _embedding_onehot(ids, table, batch, seq, rows_per_step, sublane, scale)
    return _embedding_gather(ids, table, batch, seq, rows_per_step, sublane, scale)


if __name__ == "__main__":
    # Small shapes consistent with the module's forward.
    batch, seq = 2, 16
    vocab, model_dim = 64, 128

    key = jax.random.PRNGKey(0)
    k_tab, k_ids = jax.random.split(key)

    # Deterministic "nn.Embedding" weight init (N(0,1), as in PyTorch default).
    table = jax.random.normal(k_tab, (vocab, model_dim), dtype=jnp.float32)
    x = jax.random.randint(k_ids, (batch, seq), 0, vocab, dtype=jnp.int32)

    ref = table[x] * math.sqrt(model_dim)

    # 1) Resident-table one-hot MXU fast path (the 32 KiB demo table fits VMEM).
    out_fast = jax.block_until_ready(embedding_forward(x, table))
    assert out_fast.shape == (batch, seq, model_dim)
    assert jnp.allclose(out_fast, ref, atol=1e-5, rtol=1e-5)

    # 2) HBM double-buffered DMA row-gather path (forced; used for large tables).
    #    rows_per_step=8 keeps a multi-step grid at this toy size so the
    #    cross-step prefetch and aggregate slot wait are exercised.
    out_gather = jax.block_until_ready(
        embedding_forward(x, table, rows_per_step=8, fast_path_max_table_bytes=0))
    assert out_gather.shape == (batch, seq, model_dim)
    assert jnp.allclose(out_gather, ref, atol=1e-5, rtol=1e-5)

    print("KERNEL_OK")
</pallas_src>

<mosaic_0001>
module attributes {stable_mosaic.version = 11 : i64} {
  func.func @_onehot_kernel(%arg0: i32, %arg1: memref<32x1xi32, #tpu.memory_space<vmem>>, %arg2: memref<64x128xf32, #tpu.memory_space<vmem>>, %arg3: memref<32x128xf32, #tpu.memory_space<vmem>>) attributes {dimension_semantics = [#tpu.dimension_semantics<parallel>], iteration_bounds = array<i64: 1>, scalar_prefetch = 0 : i64, scratch_operands = 0 : i64, tpu.core_type = #tpu.core_type<tc>, window_params = [{transform_indices = @transform_0, window_bounds = array<i64: 32, 1>}, {pipeline_mode = #tpu.pipeline_mode<synchronous>, transform_indices = @transform_1, window_bounds = array<i64: 64, 128>}, {transform_indices = @transform_2, window_bounds = array<i64: 32, 128>}]} {
    %c0 = arith.constant 0 : index
    %c0_0 = arith.constant 0 : index
    %0 = vector.load %arg1[%c0, %c0_0] : memref<32x1xi32, #tpu.memory_space<vmem>>, vector<32x1xi32>
    %1 = tpu.iota {dimensions = array<i32: 1>} : vector<32x64xi32>
    %2 = vector.broadcast %0 : vector<32x1xi32> to vector<32x64xi32>
    %3 = arith.cmpi eq, %2, %1 : vector<32x64xi32>
    %4 = arith.extui %3 : vector<32x64xi1> to vector<32x64xi32>
    %5 = arith.sitofp %4 : vector<32x64xi32> to vector<32x64xf32>
    %c0_1 = arith.constant 0 : index
    %c0_2 = arith.constant 0 : index
    %6 = vector.load %arg2[%c0_1, %c0_2] : memref<64x128xf32, #tpu.memory_space<vmem>>, vector<64x128xf32>
    %cst = arith.constant dense<0.000000e+00> : vector<32x128xf32>
    %7 = tpu.matmul %5, %6, %cst {dimension_numbers = #tpu.dot_dimension_numbers<[1], [0], [0], [1], [0, 0, 1, 1], [], []>} : vector<32x64xf32>, vector<64x128xf32>, vector<32x128xf32> -> vector<32x128xf32>
    %cst_3 = arith.constant 11.3137083 : f32
    %8 = vector.broadcast %cst_3 : f32 to vector<32x128xf32>
    %9 = arith.mulf %7, %8 : vector<32x128xf32>
    %c0_4 = arith.constant 0 : index
    %c0_5 = arith.constant 0 : index
    %10 = vector.load %arg3[%c0_4, %c0_5] : memref<32x128xf32, #tpu.memory_space<vmem>>, vector<32x128xf32>
    tpu.vector_store %arg3[%c0_4, %c0_5], %9 {strides = array<i32>} : memref<32x128xf32, #tpu.memory_space<vmem>>, vector<32x128xf32>,
    return
  }
  func.func @transform_0(%arg0: i32) -> (i32, i32) {
    %c0_i32 = arith.constant 0 : i32
    %c0_i32_0 = arith.constant 0 : i32
    return %arg0, %c0_i32 : i32, i32
  }
  func.func @transform_1(%arg0: i32) -> (i32, i32) {
    %c0_i32 = arith.constant 0 : i32
    %c0_i32_0 = arith.constant 0 : i32
    %c0_i32_1 = arith.constant 0 : i32
    return %c0_i32, %c0_i32_0 : i32, i32
  }
  func.func @transform_2(%arg0: i32) -> (i32, i32) {
    %c0_i32 = arith.constant 0 : i32
    %c0_i32_0 = arith.constant 0 : i32
    return %arg0, %c0_i32 : i32, i32
  }
}

</mosaic_0001>

<llo_original>
// kernel: tpu_custom_call.1
$region0: #{tpu_custom_call.1}
  #allocation0 [shape = 'u32[]', space=smem, size = 0x4, offset = 0x4, fixed_abs, tag = 'smem constant byte address 0x4 - core index']
  #allocation1 [shape = 'u32[72,128]{1,0:T(1,128)}', space=vmem, size = 0x9000, scoped, tag = 'internal scratch']
  %s0 = inlined_call_operand.vmem [shape: s32[32,1], index: 0, kind: input, shape index: {}]
  %s1 = inlined_call_operand.hbm [shape: f32[64,128], index: 1, kind: input, shape index: {}]
  %s2 = inlined_call_operand.hbm [shape: f32[32,128], index: 2, kind: output, shape index: {}]
  %s3 = sld [smem:[#allocation0]]
  $region22: #{tpu_custom_call.1} parent=0
    _
  %s5 = ssub.s32 1, %s3
  %s6 = scalar_select 0, %s5, %s3
  $region1: #{tpu_custom_call.1} parent=0
    #allocation2 [shape = 'u8[32768]{0}', space=vmem, size = 0x8000, scoped, tag = 'input window, operand 1, single buffered']
    #allocation3 [shape = 's32[1]{0}', space=sflag, size = 0x4, scoped, tag = 'scoped memory for tpu_custom_call.1']
    #allocation4 [shape = 's32[1]{0}', space=sflag, size = 0x4, scoped, tag = 'scoped memory for tpu_custom_call.1']
    #allocation5 [shape = 'u8[16384]{0}', space=vmem, size = 0x4000, scoped, tag = 'output window, operand 0, single buffered']
    %7 = vsyncpa [#allocation3], 0
    %8 = vsyncpa [#allocation4], 0
    // Predicated region
    $region2: #{tpu_custom_call.1} parent=1 // pred_check
      _
    $region3: #{tpu_custom_call.1} parent=1 // pred_check_branch
      %10 = sbr.rel (0) target = $region5
    $region4: #{tpu_custom_call.1} parent=1 // pred_region
      _
    $region5: #{tpu_custom_call.1} parent=1 // pred_fallthru
      _
    // Predicated region
    $region6: #{tpu_custom_call.1} parent=1 // pred_check
      _
    $region7: #{tpu_custom_call.1} parent=1 // pred_check_branch
      %12 = sbr.rel (0) target = $region9
    $region8: #{tpu_custom_call.1} parent=1 // pred_region
      %14 = vsyncadd [#allocation3], 0
      %s15 = sshll.u32 %s1, 4
      %s16 = int_to_ptr.hbm [resolvable:$true] %s15
      %s17 = sshll.u32 [#allocation2], 4
      %s18 = int_to_ptr.vmem [resolvable:$true] %s17
      %23 = dma.hbm_to_vmem [thread:$0]  %s16, 1024, %s18, [#allocation3], 128, 128, 8
    $region9: #{tpu_custom_call.1} parent=1 // pred_fallthru
      _
    // Predicated region
    $region10: #{tpu_custom_call.1} parent=1 // pred_check
      _
    $region11: #{tpu_custom_call.1} parent=1 // pred_check_branch
      %25 = sbr.rel (0) target = $region13
    $region12: #{tpu_custom_call.1} parent=1 // pred_region
      %27 = dma.done [#allocation3], 1024
    $region13: #{tpu_custom_call.1} parent=1 // pred_fallthru
      _
    %v28 = vld [vmem:[%s0] sm:$0xff]
    %v29 = vld [vmem:[%s0 + $0x8] sm:$0xff]
    %v30 = vld [vmem:[%s0 + $0x10] sm:$0xff]
    %v31 = vld [vmem:[%s0 + $0x18] sm:$0xff]
    %v32 = vlaneseq
    %v33 = vand.u32 %v32, 127
    %34 = vset.pattern.permute.xlu0 0
    %35 = vperm.xlu0 %34, %v28
    %v36 = vpop.permute.xlu0 %35
    %37 = vset.pattern.permute.xlu0 0
    %38 = vperm.xlu0 %37, %v29
    %v39 = vpop.permute.xlu0 %38
    %40 = vset.pattern.permute.xlu0 0
    %41 = vperm.xlu0 %40, %v30
    %v42 = vpop.permute.xlu0 %41
    %43 = vset.pattern.permute.xlu0 0
    %44 = vperm.xlu0 %43, %v31
    %v45 = vpop.permute.xlu0 %44
    %vm46 = vcmp.eq.s32.totalorder %v36, %v33
    %vm47 = vcmp.eq.s32.totalorder %v39, %v33
    %vm48 = vcmp.eq.s32.totalorder %v42, %v33
    %vm49 = vcmp.eq.s32.totalorder %v45, %v33
    %v50 = vsel %vm46, 1, 0
    %v51 = vsel %vm47, 1, 0
    %v52 = vsel %vm48, 1, 0
    %v53 = vsel %vm49, 1, 0
    %v54 = vcvt.s32.f32 %v50
    %v55 = vcvt.s32.f32 %v51
    %v56 = vcvt.s32.f32 %v52
    %v57 = vcvt.s32.f32 %v53
    %v58 = vld [vmem:[#allocation2] sm:$0xff]
    %v59 = vld [vmem:[#allocation2 + $0x8] sm:$0xff]
    %v60 = vld [vmem:[#allocation2 + $0x10] sm:$0xff]
    %v61 = vld [vmem:[#allocation2 + $0x18] sm:$0xff]
    %v62 = vld [vmem:[#allocation2 + $0x20] sm:$0xff]
    %v63 = vld [vmem:[#allocation2 + $0x28] sm:$0xff]
    %v64 = vld [vmem:[#allocation2 + $0x30] sm:$0xff]
    %v65 = vld [vmem:[#allocation2 + $0x38] sm:$0xff]
    %vm66 = vcmask 523264
    %v68 = vsel %vm66, %v54, 0
    %v71 = vsel %vm66, %v55, 0
    %v74 = vsel %vm66, %v56, 0
    %v77 = vsel %vm66, %v57, 0
    %79 = vmatpush.msra.mxu0 0.0
    %80 = vmatpush.msra.mxu0 0.0
    %81 = vmatpush.msra.mxu0 0.0
    %82 = vmatpush.msra.mxu0 0.0
    %83 = vmatpush.msra.mxu0 0.0
    %84 = vmatpush.msra.mxu0 0.0
    %85 = vmatpush.msra.mxu0 0.0
    %86 = vmatpush.msra.mxu0 0.0
    %87 = vmatpush.msra.mxu0 %v65
    %88 = vmatpush.msra.mxu0 %v64
    %89 = vmatpush.msra.mxu0 %v63
    %90 = vmatpush.msra.mxu0 %v62
    %91 = vmatpush.msra.mxu0 %v61
    %92 = vmatpush.msra.mxu0 %v60
    %93 = vmatpush.msra.mxu0 %v59
    %94 = vmatpush.msra.mxu0 %v58
    %95 = vmatmul.f32.gmra.mxu0 %v68
    %v96 = vpop.f32.mrf.mxu0
    %v97 = vadd.f32 0.0, %v96
    %98 = vmatmul.f32.gmra.mxu0 %v71
    %v99 = vpop.f32.mrf.mxu0
    %v100 = vadd.f32 0.0, %v99
    %101 = vmatmul.f32.gmra.mxu0 %v74
    %v102 = vpop.f32.mrf.mxu0
    %v103 = vadd.f32 0.0, %v102
    %104 = vmatmul.f32.gmra.mxu0 %v77
    %v105 = vpop.f32.mrf.mxu0
    %v106 = vadd.f32 0.0, %v105
    %107 = vdwg.mxu0
    %v108 = vmul.f32 %v97, 11.313708
    %v109 = vmul.f32 %v100, 11.313708
    %v110 = vmul.f32 %v103, 11.313708
    %v111 = vmul.f32 %v106, 11.313708
    %112 = vst [vmem:[#allocation5] sm:$0xff] %v108
    %113 = vst [vmem:[#allocation5 + $0x8] sm:$0xff] %v109
    %114 = vst [vmem:[#allocation5 + $0x10] sm:$0xff] %v110
    %115 = vst [vmem:[#allocation5 + $0x18] sm:$0xff] %v111
    // Predicated region
    $region14: #{tpu_custom_call.1} parent=1 // pred_check
      _
    $region15: #{tpu_custom_call.1} parent=1 // pred_check_branch
      %117 = sbr.rel (0) target = $region17
    $region16: #{tpu_custom_call.1} parent=1 // pred_region
      %119 = vsyncadd [#allocation4], 0
      %s120 = sshll.u32 [#allocation5], 4
      %s121 = int_to_ptr.vmem [resolvable:$true] %s120
      %s122 = sshll.u32 %s2, 4
      %s123 = int_to_ptr.hbm [resolvable:$true] %s122
      %128 = dma.vmem_to_hbm [thread:$0]  %s121, 512, %s123, [#allocation4], 128, 128, 8
    $region17: #{tpu_custom_call.1} parent=1 // pred_fallthru
      _
    // Predicated region
    $region18: #{tpu_custom_call.1} parent=1 // pred_check
      _
    $region19: #{tpu_custom_call.1} parent=1 // pred_check_branch
      %130 = sbr.rel (0) target = $region21
    $region20: #{tpu_custom_call.1} parent=1 // pred_region
      %132 = dma.done [#allocation4], 512
    $region21: #{tpu_custom_call.1} parent=1 // pred_fallthru
      _
    %133 = vsyncpa [#allocation3], 1
    %134 = vsyncpa [#allocation4], 1

</llo_original>
